<compile_context>
chip_gen: v7x
topology: tpu7x:2x2x1
jax: 0.10.0
libtpu: 0.0.40
codegen_flags: <defaults>
</compile_context>

<pallas_src>
import functools
import math

import jax
import jax.numpy as jnp
from jax.experimental import pallas as pl
from jax.experimental.pallas import tpu as pltpu

_MASK_NEG = -1e9


def _round_up(x, m):
    return (x + m - 1) // m * m


# ---------------------------------------------------------------------------
# Generation-aware settings (VMEM budget / tile size / megacore split)
# ---------------------------------------------------------------------------
_SETTINGS = None


def _tpu_settings():
    global _SETTINGS
    if _SETTINGS is not None:
        return _SETTINGS
    vmem_cap = None
    try:
        info = pltpu.get_tpu_info()
        vmem_cap = int(getattr(info, "vmem_capacity_bytes", 0)) or None
    except Exception:
        vmem_cap = None
    if vmem_cap is None:
        vmem_cap = 64 * 1024 * 1024                       # conservative default
    if vmem_cap >= 96 * 1024 * 1024:                      # v5e / v6e (128 MiB)
        _SETTINGS = dict(vmem_limit=96 * 1024 * 1024, tile_cap=512,
                         prefer_two_tiles=False)
    else:                                                 # v7x (64 MiB, 2 TCs)
        _SETTINGS = dict(vmem_limit=48 * 1024 * 1024, tile_cap=256,
                         prefer_two_tiles=True)
    return _SETTINGS


# ---------------------------------------------------------------------------
# Single-buffered (non double-buffered) weight BlockSpecs, with a safe probe.
# ---------------------------------------------------------------------------
_SINGLE_BUF = None


def _single_buffered_ok():
    global _SINGLE_BUF
    if _SINGLE_BUF is not None:
        return _SINGLE_BUF

    def _probe():
        try:
            spec = pl.BlockSpec((8, 128), lambda i: (0, 0),
                                pipeline_mode=pl.Buffered(1))
        except Exception:
            return False

        def _k(x_ref, o_ref):
            o_ref[...] = x_ref[...] + 1.0

        try:
            fn = pl.pallas_call(
                _k, grid=(2,),
                in_specs=[spec],
                out_specs=pl.BlockSpec((8, 128), lambda i: (0, 0)),
                out_shape=jax.ShapeDtypeStruct((8, 128), jnp.float32))
            out = jax.block_until_ready(fn(jnp.zeros((8, 128), jnp.float32)))
            return bool(jnp.allclose(out, 1.0))
        except Exception:
            return False

    _SINGLE_BUF = _probe()
    return _SINGLE_BUF


def _const_spec(shape):
    """BlockSpec for a weight that stays VMEM-resident across grid steps."""
    nd = len(shape)
    imap = lambda *args: (0,) * nd
    if _single_buffered_ok():
        return pl.BlockSpec(shape, imap, pipeline_mode=pl.Buffered(1))
    return pl.BlockSpec(shape, imap)


# ---------------------------------------------------------------------------
# In-kernel helpers (fp32 elementwise math)
# ---------------------------------------------------------------------------
def _layernorm(x, g, b, eps=1e-5):
    mu = jnp.mean(x, axis=-1, keepdims=True)
    var = jnp.mean((x - mu) ** 2, axis=-1, keepdims=True)
    return (x - mu) * jax.lax.rsqrt(var + eps) * g + b


def _gelu_exact(x):
    # matches torch.nn.GELU() (erf-based)
    return 0.5 * x * (1.0 + jax.lax.erf(x * 0.7071067811865476))


# ---------------------------------------------------------------------------
# Kernel A: LN1 + fused QKV projection -> head-major bf16 Q, K, V
# ---------------------------------------------------------------------------
def _qkv_kernel(n_heads, d_head, x_ref, g_ref, b_ref, wqkv_ref, bqkv_ref,
                q_ref, k_ref, v_ref):
    x = x_ref[...].astype(jnp.float32)                   # (T, D)
    d_model = x.shape[-1]
    y = _layernorm(x, g_ref[...], b_ref[...])
    # softmax scale already folded into the Q columns of wqkv/bqkv
    qkv = (jnp.dot(y.astype(jnp.bfloat16), wqkv_ref[...],
                   preferred_element_type=jnp.float32)
           + bqkv_ref[...]).astype(jnp.bfloat16)          # (T, 3D)

    for h in range(n_heads):                              # static head split
        q_ref[h] = qkv[:, h * d_head:(h + 1) * d_head]
        k_ref[h] = qkv[:, d_model + h * d_head:d_model + (h + 1) * d_head]
        v_ref[h] = qkv[:, 2 * d_model + h * d_head:
                       2 * d_model + (h + 1) * d_head]


# ---------------------------------------------------------------------------
# Kernel B: flash attention + out-proj + residual + LN2 + MLP + residual
# ---------------------------------------------------------------------------
def _attn_mlp_kernel(lo_ref, hi_ref,                       # scalar prefetch
                     bq_ref, bk_ref, q_ref, k_ref, v_ref, x_ref,
                     wo_ref, bo_ref, g2_ref, b2_ref,
                     w1_ref, b1_ref, w2_ref, b2m_ref,
                     o_ref, m_sc, l_sc, acc_sc):
    qi = pl.program_id(0)
    ki = pl.program_id(1)

    @pl.when(ki == 0)
    def _():
        m_sc[...] = jnp.full_like(m_sc, -jnp.inf)
        l_sc[...] = jnp.zeros_like(l_sc)
        acc_sc[...] = jnp.zeros_like(acc_sc)

    # block-diagonal batch mask: only kv tiles inside [lo, hi] can match
    in_window = jnp.logical_and(ki >= lo_ref[qi], ki <= hi_ref[qi])

    @pl.when(in_window)
    def _():
        # additive mask from batch indices (never materialized in HBM)
        mask = jnp.where(bq_ref[...] == bk_ref[...], 0.0,
                         _MASK_NEG).astype(jnp.float32)            # (TQ, TK)
        s = jnp.einsum('hqd,hkd->hqk', q_ref[...], k_ref[...],
                       preferred_element_type=jnp.float32)          # (H,TQ,TK)
        s = s + mask[None, :, :]

        m_prev = m_sc[...]
        m_new = jnp.maximum(m_prev, jnp.max(s, axis=-1, keepdims=True))
        alpha = jnp.exp(m_prev - m_new)
        p = jnp.exp(s - m_new)
        l_sc[...] = alpha * l_sc[...] + jnp.sum(p, axis=-1, keepdims=True)
        acc_sc[...] = alpha * acc_sc[...] + jnp.einsum(
            'hqk,hkd->hqd', p.astype(v_ref.dtype), v_ref[...],
            preferred_element_type=jnp.float32)
        m_sc[...] = m_new

    @pl.when(ki == pl.num_programs(1) - 1)
    def _():
        l = l_sc[...]
        l = jnp.where(l > 0.0, l, 1.0)          # guard fully-masked pad rows
        ctx = acc_sc[...] * pl.reciprocal(l, approx=True)       # (H, TQ, Dh)

        # head merge folded into the out-projection (no concatenate):
        attn = jnp.einsum('hqd,hdo->hqo', ctx.astype(jnp.bfloat16),
                          wo_ref[...], preferred_element_type=jnp.float32)
        attn = jnp.sum(attn, axis=0) + bo_ref[...]               # (TQ, D)

        x1 = x_ref[...].astype(jnp.float32) + attn               # residual 1
        y = _layernorm(x1, g2_ref[...], b2_ref[...])
        h1 = _gelu_exact(jnp.dot(y.astype(jnp.bfloat16), w1_ref[...],
                                 preferred_element_type=jnp.float32)
                         + b1_ref[...])
        mlp = jnp.dot(h1.astype(jnp.bfloat16), w2_ref[...],
                      preferred_element_type=jnp.float32) + b2m_ref[...]
        o_ref[...] = (x1 + mlp).astype(o_ref.dtype)              # residual 2


# ---------------------------------------------------------------------------
# One TransformerBlock = 2 gridded pallas_calls
# ---------------------------------------------------------------------------
def _run_block(x, bidx_col, bidx_row, kv_lo, kv_hi, p, n_heads, tile_n,
               settings, residual_dtype):
    n_pad, d_model = x.shape
    n_tiles = n_pad // tile_n
    d_head = d_model // n_heads
    hidden = p["w1"].shape[1]
    vmem_limit = settings["vmem_limit"]

    # --- A) LN1 + QKV projection ---------------------------------------------
    qkv_out_spec = lambda: pl.BlockSpec((n_heads, tile_n, d_head),
                                        lambda i: (0, i, 0))
    q, k, v = pl.pallas_call(
        functools.partial(_qkv_kernel, n_heads, d_head),
        grid=(n_tiles,),
        in_specs=[
            pl.BlockSpec((tile_n, d_model), lambda i: (i, 0)),
            _const_spec((1, d_model)), _const_spec((1, d_model)),
            _const_spec((d_model, 3 * d_model)), _const_spec((1, 3 * d_model)),
        ],
        out_specs=(qkv_out_spec(), qkv_out_spec(), qkv_out_spec()),
        out_shape=tuple(
            jax.ShapeDtypeStruct((n_heads, n_pad, d_head), jnp.bfloat16)
            for _ in range(3)),
        compiler_params=pltpu.CompilerParams(
            dimension_semantics=("parallel",),
            vmem_limit_bytes=vmem_limit),
    )(x, p["ln1_g"], p["ln1_b"], p["wqkv"], p["bqkv"])

    # --- B) fused flash attention + out-proj + MLP ---------------------------
    def kv_map(qi, ki, lo, hi):
        # clamp into the per-q-tile overlap window -> no DMA for skipped tiles
        ki_c = jnp.maximum(lo[qi], jnp.minimum(ki, hi[qi]))
        return (0, ki_c, 0)

    x_out = pl.pallas_call(
        _attn_mlp_kernel,
        grid_spec=pltpu.PrefetchScalarGridSpec(
            num_scalar_prefetch=2,
            grid=(n_tiles, n_tiles),
            in_specs=[
                pl.BlockSpec((tile_n, 1), lambda qi, ki, lo, hi: (qi, 0)),
                pl.BlockSpec((1, tile_n), lambda qi, ki, lo, hi: (0, ki)),
                pl.BlockSpec((n_heads, tile_n, d_head),
                             lambda qi, ki, lo, hi: (0, qi, 0)),
                pl.BlockSpec((n_heads, tile_n, d_head), kv_map),
                pl.BlockSpec((n_heads, tile_n, d_head), kv_map),
                pl.BlockSpec((tile_n, d_model),
                             lambda qi, ki, lo, hi: (qi, 0)),
                _const_spec((n_heads, d_head, d_model)),     # wo (head-major)
                _const_spec((1, d_model)),                   # bo
                _const_spec((1, d_model)), _const_spec((1, d_model)),  # ln2
                _const_spec((d_model, hidden)), _const_spec((1, hidden)),
                _const_spec((hidden, d_model)), _const_spec((1, d_model)),
            ],
            out_specs=pl.BlockSpec((tile_n, d_model),
                                   lambda qi, ki, lo, hi: (qi, 0)),
            scratch_shapes=[
                pltpu.VMEM((n_heads, tile_n, 1), jnp.float32),
                pltpu.VMEM((n_heads, tile_n, 1), jnp.float32),
                pltpu.VMEM((n_heads, tile_n, d_head), jnp.float32),
            ],
        ),
        out_shape=jax.ShapeDtypeStruct((n_pad, d_model), residual_dtype),
        compiler_params=pltpu.CompilerParams(
            dimension_semantics=("parallel", "arbitrary"),
            vmem_limit_bytes=vmem_limit),
    )(kv_lo, kv_hi, bidx_col, bidx_row, q, k, v, x,
      p["wo_h"], p["bo"], p["ln2_g"], p["ln2_b"],
      p["w1"], p["b1"], p["w2"], p["b2"])
    return x_out


# ---------------------------------------------------------------------------
# Parameter prep (hoisted out of the forward -- run once at weight-load time)
# ---------------------------------------------------------------------------
def prepare_transformer_params(layer_params, n_heads):
    f32, bf16 = jnp.float32, jnp.bfloat16
    prepped = []
    for p in layer_params:
        d_model = p["wq"].shape[0]
        d_head = d_model // n_heads
        scale = 1.0 / math.sqrt(d_head)
        prepped.append(dict(
            ln1_g=p["ln1_g"].astype(f32), ln1_b=p["ln1_b"].astype(f32),
            # fold softmax scale into the Q projection
            wqkv=jnp.concatenate([p["wq"] * scale, p["wk"], p["wv"]],
                                 axis=1).astype(bf16),
            bqkv=jnp.concatenate([p["bq"] * scale, p["bk"], p["bv"]],
                                 axis=1).astype(f32),
            # out-projection reshaped head-major so the head merge fuses in
            wo_h=p["wo"].reshape(n_heads, d_head, d_model).astype(bf16),
            bo=p["bo"].astype(f32),
            ln2_g=p["ln2_g"].astype(f32), ln2_b=p["ln2_b"].astype(f32),
            w1=p["w1"].astype(bf16), b1=p["b1"].astype(f32),
            w2=p["w2"].astype(bf16), b2=p["b2"].astype(f32),
        ))
    return prepped


# ---------------------------------------------------------------------------
# Tiling selection
# ---------------------------------------------------------------------------
def _auto_tile(n, settings):
    cap = settings["tile_cap"]
    if n > cap:
        tile = cap
        n_pad = _round_up(n, tile)
    elif settings["prefer_two_tiles"] and n > 128:
        # give both v7x TensorCores a q tile even for small inputs
        tile = _round_up((n + 1) // 2, 128)
        n_pad = 2 * tile
    else:
        tile = n_pad = _round_up(max(n, 8), 8)
    return tile, n_pad


# ---------------------------------------------------------------------------
# Transformer.forward equivalent
# ---------------------------------------------------------------------------
def transformer_forward(features, coords, batch_idx, prepped_params, n_heads,
                        tile_n=None, residual_dtype=jnp.float32):
    del coords  # unused by the reference forward as well
    n, d_model = features.shape
    assert d_model % n_heads == 0
    settings = _tpu_settings()

    if tile_n is None:
        tile_n, n_pad = _auto_tile(n, settings)
    else:
        assert tile_n % 8 == 0
        n_pad = _round_up(max(n, tile_n), tile_n)
        assert n_pad == tile_n or tile_n % 128 == 0

    x = features.astype(residual_dtype)
    bidx = batch_idx.astype(jnp.int32)
    if n_pad != n:
        pad = n_pad - n
        x = jnp.pad(x, ((0, pad), (0, 0)))
        pad_val = jnp.max(bidx) + 1          # pad tokens never mix with real
        bidx = jnp.concatenate([bidx, jnp.full((pad,), pad_val, jnp.int32)])

    n_tiles = n_pad // tile_n
    bidx_col = bidx.reshape(n_pad, 1)
    bidx_row = bidx.reshape(1, n_pad)

    # per-kv-tile window of potentially-unmasked tiles for each q tile
    tmin = jnp.min(bidx.reshape(n_tiles, tile_n), axis=1)
    tmax = jnp.max(bidx.reshape(n_tiles, tile_n), axis=1)
    ov = (tmin[:, None] <= tmax[None, :]) & (tmin[None, :] <= tmax[:, None])
    ids = jnp.arange(n_tiles, dtype=jnp.int32)
    kv_lo = jnp.min(jnp.where(ov, ids[None, :], n_tiles - 1), axis=1)
    kv_lo = kv_lo.astype(jnp.int32)
    kv_hi = jnp.max(jnp.where(ov, ids[None, :], 0), axis=1).astype(jnp.int32)

    for p in prepped_params:
        x = _run_block(x, bidx_col, bidx_row, kv_lo, kv_hi, p, n_heads,
                       tile_n, settings, residual_dtype)
    return x[:n]


# ---------------------------------------------------------------------------
# Deterministic synthetic parameter init ((in, out) layout for x @ W)
# ---------------------------------------------------------------------------
def init_block_params(key, d_model, hidden):
    ks = jax.random.split(key, 6)
    s = 0.02

    def nrm(k, shape):
        return jax.random.normal(k, shape, jnp.float32) * s

    zeros = lambda shape: jnp.zeros(shape, jnp.float32)
    ones = lambda shape: jnp.ones(shape, jnp.float32)
    return dict(
        ln1_g=ones((1, d_model)), ln1_b=zeros((1, d_model)),
        wq=nrm(ks[0], (d_model, d_model)), bq=zeros((1, d_model)),
        wk=nrm(ks[1], (d_model, d_model)), bk=zeros((1, d_model)),
        wv=nrm(ks[2], (d_model, d_model)), bv=zeros((1, d_model)),
        wo=nrm(ks[3], (d_model, d_model)), bo=zeros((1, d_model)),
        ln2_g=ones((1, d_model)), ln2_b=zeros((1, d_model)),
        w1=nrm(ks[4], (d_model, hidden)), b1=zeros((1, hidden)),
        w2=nrm(ks[5], (hidden, d_model)), b2=zeros((1, d_model)),
    )


# ---------------------------------------------------------------------------
# Pure-JAX reference (for verification only)
# ---------------------------------------------------------------------------
def _reference_forward(features, batch_idx, layer_params, n_heads):
    x = features.astype(jnp.float32)
    n, d_model = x.shape
    d_head = d_model // n_heads
    bias = jnp.where(batch_idx[:, None] == batch_idx[None, :], 0.0,
                     _MASK_NEG)[None]
    for p in layer_params:
        y = _layernorm(x, p["ln1_g"], p["ln1_b"])
        q = y @ p["wq"] + p["bq"]
        k = y @ p["wk"] + p["bk"]
        v = y @ p["wv"] + p["bv"]
        split = lambda t: t.reshape(n, n_heads, d_head).transpose(1, 0, 2)
        s = jnp.einsum('hqd,hkd->hqk', split(q), split(k)) / math.sqrt(d_head)
        a = jax.nn.softmax(s + bias, axis=-1)
        ctx = jnp.einsum('hqk,hkd->hqd', a, split(v))
        ctx = ctx.transpose(1, 0, 2).reshape(n, d_model)
        x = x + (ctx @ p["wo"] + p["bo"])
        y2 = _layernorm(x, p["ln2_g"], p["ln2_b"])
        x = x + (_gelu_exact(y2 @ p["w1"] + p["b1"]) @ p["w2"] + p["b2"])
    return x


if __name__ == "__main__":
    key = jax.random.PRNGKey(0)
    k_small, k_big = jax.random.split(key)

    # ---- tiny config (required smoke test) ----------------------------------
    N, d_model, n_heads, n_layers, mlp_ratio = 8, 32, 2, 2, 4.0
    hidden = int(d_model * mlp_ratio)
    kf, kp = jax.random.split(k_small)
    features = jax.random.normal(kf, (N, d_model), jnp.float32)
    coords = jnp.zeros((N, 2), jnp.float32)                    # unused
    batch_idx = jnp.array([0, 0, 0, 1, 1, 1, 2, 2], jnp.int32)
    raw_params = [init_block_params(k, d_model, hidden)
                  for k in jax.random.split(kp, n_layers)]
    prepped = prepare_transformer_params(raw_params, n_heads)  # hoisted prep

    out = transformer_forward(features, coords, batch_idx, prepped, n_heads)
    out = jax.block_until_ready(out)
    assert out.shape == (N, d_model)
    assert bool(jnp.all(jnp.isfinite(out)))
    ref = _reference_forward(features, batch_idx, raw_params, n_heads)
    assert bool(jnp.allclose(out, ref, rtol=3e-2, atol=3e-2)), \
        float(jnp.max(jnp.abs(out - ref)))

    # ---- multi-tile config (exercises tiling, padding and mask skipping) ----
    N2, d2, h2, l2 = 250, 128, 4, 2
    hid2 = int(d2 * 4.0)
    kf2, kp2 = jax.random.split(k_big)
    feats2 = jax.random.normal(kf2, (N2, d2), jnp.float32)
    coords2 = jnp.zeros((N2, 2), jnp.float32)
    bidx2 = jnp.concatenate([jnp.zeros((128,), jnp.int32),
                             jnp.ones((N2 - 128,), jnp.int32)])
    raw2 = [init_block_params(k, d2, hid2) for k in jax.random.split(kp2, l2)]
    prepped2 = prepare_transformer_params(raw2, h2)

    out2 = jax.block_until_ready(
        transformer_forward(feats2, coords2, bidx2, prepped2, h2, tile_n=128))
    ref2 = _reference_forward(feats2, bidx2, raw2, h2)
    assert bool(jnp.allclose(out2, ref2, rtol=3e-2, atol=3e-2)), \
        float(jnp.max(jnp.abs(out2 - ref2)))

    print("KERNEL_OK")
</pallas_src>

<mosaic_0001>
module attributes {stable_mosaic.version = 11 : i64} {
  func.func @_k(%arg0: i32, %arg1: memref<8x128xf32, #tpu.memory_space<vmem>>, %arg2: memref<8x128xf32, #tpu.memory_space<vmem>>) attributes {dimension_semantics = [#tpu.dimension_semantics<arbitrary>], iteration_bounds = array<i64: 2>, scalar_prefetch = 0 : i64, scratch_operands = 0 : i64, tpu.core_type = #tpu.core_type<tc>, window_params = [{pipeline_mode = #tpu.pipeline_mode<synchronous>, transform_indices = @transform_0, window_bounds = array<i64: 8, 128>}, {pipeline_mode = #tpu.pipeline_mode<synchronous>, transform_indices = @transform_1, window_bounds = array<i64: 8, 128>}]} {
    %c0 = arith.constant 0 : index
    %c0_0 = arith.constant 0 : index
    %0 = vector.load %arg1[%c0, %c0_0] : memref<8x128xf32, #tpu.memory_space<vmem>>, vector<8x128xf32>
    %cst = arith.constant 1.000000e+00 : f32
    %1 = vector.broadcast %cst : f32 to vector<8x128xf32>
    %2 = arith.addf %0, %1 : vector<8x128xf32>
    %c0_1 = arith.constant 0 : index
    %c0_2 = arith.constant 0 : index
    %3 = vector.load %arg2[%c0_1, %c0_2] : memref<8x128xf32, #tpu.memory_space<vmem>>, vector<8x128xf32>
    tpu.vector_store %arg2[%c0_1, %c0_2], %2 {strides = array<i32>} : memref<8x128xf32, #tpu.memory_space<vmem>>, vector<8x128xf32>,
    return
  }
  func.func @transform_0(%arg0: i32) -> (i32, i32) {
    %c0_i32 = arith.constant 0 : i32
    %c0_i32_0 = arith.constant 0 : i32
    %c0_i32_1 = arith.constant 0 : i32
    return %c0_i32, %c0_i32_0 : i32, i32
  }
  func.func @transform_1(%arg0: i32) -> (i32, i32) {
    %c0_i32 = arith.constant 0 : i32
    %c0_i32_0 = arith.constant 0 : i32
    %c0_i32_1 = arith.constant 0 : i32
    return %c0_i32, %c0_i32_0 : i32, i32
  }
}

module attributes {stable_mosaic.version = 11 : i64} {
  func.func @_qkv_kernel(%arg0: i32, %arg1: memref<8x32xf32, #tpu.memory_space<vmem>>, %arg2: memref<1x32xf32, #tpu.memory_space<vmem>>, %arg3: memref<1x32xf32, #tpu.memory_space<vmem>>, %arg4: memref<32x96xbf16, #tpu.memory_space<vmem>>, %arg5: memref<1x96xf32, #tpu.memory_space<vmem>>, %arg6: memref<2x8x16xbf16, #tpu.memory_space<vmem>>, %arg7: memref<2x8x16xbf16, #tpu.memory_space<vmem>>, %arg8: memref<2x8x16xbf16, #tpu.memory_space<vmem>>) attributes {dimension_semantics = [#tpu.dimension_semantics<parallel>], iteration_bounds = array<i64: 1>, scalar_prefetch = 0 : i64, scratch_operands = 0 : i64, tpu.core_type = #tpu.core_type<tc>, window_params = [{transform_indices = @transform_0, window_bounds = array<i64: 8, 32>}, {pipeline_mode = #tpu.pipeline_mode<synchronous>, transform_indices = @transform_1, window_bounds = array<i64: 1, 32>}, {pipeline_mode = #tpu.pipeline_mode<synchronous>, transform_indices = @transform_2, window_bounds = array<i64: 1, 32>}, {pipeline_mode = #tpu.pipeline_mode<synchronous>, transform_indices = @transform_3, window_bounds = array<i64: 32, 96>}, {pipeline_mode = #tpu.pipeline_mode<synchronous>, transform_indices = @transform_4, window_bounds = array<i64: 1, 96>}, {transform_indices = @transform_5, window_bounds = array<i64: 2, 8, 16>}, {transform_indices = @transform_6, window_bounds = array<i64: 2, 8, 16>}, {transform_indices = @transform_7, window_bounds = array<i64: 2, 8, 16>}]} {
    %c0 = arith.constant 0 : index
    %c0_0 = arith.constant 0 : index
    %0 = vector.load %arg1[%c0, %c0_0] : memref<8x32xf32, #tpu.memory_space<vmem>>, vector<8x32xf32>
    %c0_1 = arith.constant 0 : index
    %c0_2 = arith.constant 0 : index
    %1 = vector.load %arg2[%c0_1, %c0_2] : memref<1x32xf32, #tpu.memory_space<vmem>>, vector<1x32xf32>
    %c0_3 = arith.constant 0 : index
    %c0_4 = arith.constant 0 : index
    %2 = vector.load %arg3[%c0_3, %c0_4] : memref<1x32xf32, #tpu.memory_space<vmem>>, vector<1x32xf32>
    %cst = arith.constant dense<0.000000e+00> : vector<8xf32>
    %3 = vector.multi_reduction <add>, %0, %cst [1] : vector<8x32xf32> to vector<8xf32>
    %4 = vector.shape_cast %3 : vector<8xf32> to vector<8x1xf32>
    %cst_5 = arith.constant 3.200000e+01 : f32
    %5 = vector.broadcast %cst_5 : f32 to vector<8x1xf32>
    %6 = arith.divf %4, %5 : vector<8x1xf32>
    %7 = vector.broadcast %6 : vector<8x1xf32> to vector<8x32xf32>
    %8 = arith.subf %0, %7 : vector<8x32xf32>
    %9 = arith.mulf %8, %8 : vector<8x32xf32>
    %cst_6 = arith.constant dense<0.000000e+00> : vector<8xf32>
    %10 = vector.multi_reduction <add>, %9, %cst_6 [1] : vector<8x32xf32> to vector<8xf32>
    %11 = vector.shape_cast %10 : vector<8xf32> to vector<8x1xf32>
    %cst_7 = arith.constant 3.200000e+01 : f32
    %12 = vector.broadcast %cst_7 : f32 to vector<8x1xf32>
    %13 = arith.divf %11, %12 : vector<8x1xf32>
    %14 = vector.broadcast %6 : vector<8x1xf32> to vector<8x32xf32>
    %15 = arith.subf %0, %14 : vector<8x32xf32>
    %cst_8 = arith.constant 9.99999974E-6 : f32
    %16 = vector.broadcast %cst_8 : f32 to vector<8x1xf32>
    %17 = arith.addf %13, %16 : vector<8x1xf32>
    %18 = math.rsqrt %17 : vector<8x1xf32>
    %19 = vector.broadcast %18 : vector<8x1xf32> to vector<8x32xf32>
    %20 = arith.mulf %15, %19 : vector<8x32xf32>
    %21 = vector.broadcast %1 : vector<1x32xf32> to vector<8x32xf32>
    %22 = arith.mulf %20, %21 : vector<8x32xf32>
    %23 = vector.broadcast %2 : vector<1x32xf32> to vector<8x32xf32>
    %24 = arith.addf %22, %23 : vector<8x32xf32>
    %25 = arith.truncf %24 : vector<8x32xf32> to vector<8x32xbf16>
    %c0_9 = arith.constant 0 : index
    %c0_10 = arith.constant 0 : index
    %26 = vector.load %arg4[%c0_9, %c0_10] : memref<32x96xbf16, #tpu.memory_space<vmem>>, vector<32x96xbf16>
    %cst_11 = arith.constant dense<0.000000e+00> : vector<8x96xf32>
    %27 = tpu.matmul %25, %26, %cst_11 {dimension_numbers = #tpu.dot_dimension_numbers<[1], [0], [0], [1], [0, 0, 1, 1], [], []>} : vector<8x32xbf16>, vector<32x96xbf16>, vector<8x96xf32> -> vector<8x96xf32>
    %c0_12 = arith.constant 0 : index
    %c0_13 = arith.constant 0 : index
    %28 = vector.load %arg5[%c0_12, %c0_13] : memref<1x96xf32, #tpu.memory_space<vmem>>, vector<1x96xf32>
    %29 = vector.broadcast %28 : vector<1x96xf32> to vector<8x96xf32>
    %30 = arith.addf %27, %29 : vector<8x96xf32>
    %31 = arith.truncf %30 : vector<8x96xf32> to vector<8x96xbf16>
    %32 = vector.extract_strided_slice %31 {offsets = [0, 0], sizes = [8, 16], strides = [1, 1]} : vector<8x96xbf16> to vector<8x16xbf16>
    %c0_14 = arith.constant 0 : index
    %c0_15 = arith.constant 0 : index
    %c0_16 = arith.constant 0 : index
    %33 = vector.load %arg6[%c0_14, %c0_15, %c0_16] : memref<2x8x16xbf16, #tpu.memory_space<vmem>>, vector<1x8x16xbf16>
    %34 = vector.shape_cast %33 : vector<1x8x16xbf16> to vector<8x16xbf16>
    %35 = vector.shape_cast %32 : vector<8x16xbf16> to vector<1x8x16xbf16>
    tpu.vector_store %arg6[%c0_14, %c0_15, %c0_16], %35 {strides = array<i32>} : memref<2x8x16xbf16, #tpu.memory_space<vmem>>, vector<1x8x16xbf16>,
    %36 = vector.extract_strided_slice %31 {offsets = [0, 32], sizes = [8, 16], strides = [1, 1]} : vector<8x96xbf16> to vector<8x16xbf16>
    %c0_17 = arith.constant 0 : index
    %c0_18 = arith.constant 0 : index
    %c0_19 = arith.constant 0 : index
    %37 = vector.load %arg7[%c0_17, %c0_18, %c0_19] : memref<2x8x16xbf16, #tpu.memory_space<vmem>>, vector<1x8x16xbf16>
    %38 = vector.shape_cast %37 : vector<1x8x16xbf16> to vector<8x16xbf16>
    %39 = vector.shape_cast %36 : vector<8x16xbf16> to vector<1x8x16xbf16>
    tpu.vector_store %arg7[%c0_17, %c0_18, %c0_19], %39 {strides = array<i32>} : memref<2x8x16xbf16, #tpu.memory_space<vmem>>, vector<1x8x16xbf16>,
    %40 = vector.extract_strided_slice %31 {offsets = [0, 64], sizes = [8, 16], strides = [1, 1]} : vector<8x96xbf16> to vector<8x16xbf16>
    %c0_20 = arith.constant 0 : index
    %c0_21 = arith.constant 0 : index
    %c0_22 = arith.constant 0 : index
    %41 = vector.load %arg8[%c0_20, %c0_21, %c0_22] : memref<2x8x16xbf16, #tpu.memory_space<vmem>>, vector<1x8x16xbf16>
    %42 = vector.shape_cast %41 : vector<1x8x16xbf16> to vector<8x16xbf16>
    %43 = vector.shape_cast %40 : vector<8x16xbf16> to vector<1x8x16xbf16>
    tpu.vector_store %arg8[%c0_20, %c0_21, %c0_22], %43 {strides = array<i32>} : memref<2x8x16xbf16, #tpu.memory_space<vmem>>, vector<1x8x16xbf16>,
    %44 = vector.extract_strided_slice %31 {offsets = [0, 16], sizes = [8, 16], strides = [1, 1]} : vector<8x96xbf16> to vector<8x16xbf16>
    %c1 = arith.constant 1 : index
    %c0_23 = arith.constant 0 : index
    %c0_24 = arith.constant 0 : index
    %45 = vector.load %arg6[%c1, %c0_23, %c0_24] : memref<2x8x16xbf16, #tpu.memory_space<vmem>>, vector<1x8x16xbf16>
    %46 = vector.shape_cast %45 : vector<1x8x16xbf16> to vector<8x16xbf16>
    %47 = vector.shape_cast %44 : vector<8x16xbf16> to vector<1x8x16xbf16>
    tpu.vector_store %arg6[%c1, %c0_23, %c0_24], %47 {strides = array<i32>} : memref<2x8x16xbf16, #tpu.memory_space<vmem>>, vector<1x8x16xbf16>,
    %48 = vector.extract_strided_slice %31 {offsets = [0, 48], sizes = [8, 16], strides = [1, 1]} : vector<8x96xbf16> to vector<8x16xbf16>
    %c1_25 = arith.constant 1 : index
    %c0_26 = arith.constant 0 : index
    %c0_27 = arith.constant 0 : index
    %49 = vector.load %arg7[%c1_25, %c0_26, %c0_27] : memref<2x8x16xbf16, #tpu.memory_space<vmem>>, vector<1x8x16xbf16>
    %50 = vector.shape_cast %49 : vector<1x8x16xbf16> to vector<8x16xbf16>
    %51 = vector.shape_cast %48 : vector<8x16xbf16> to vector<1x8x16xbf16>
    tpu.vector_store %arg7[%c1_25, %c0_26, %c0_27], %51 {strides = array<i32>} : memref<2x8x16xbf16, #tpu.memory_space<vmem>>, vector<1x8x16xbf16>,
    %52 = vector.extract_strided_slice %31 {offsets = [0, 80], sizes = [8, 16], strides = [1, 1]} : vector<8x96xbf16> to vector<8x16xbf16>
    %c1_28 = arith.constant 1 : index
    %c0_29 = arith.constant 0 : index
    %c0_30 = arith.constant 0 : index
    %53 = vector.load %arg8[%c1_28, %c0_29, %c0_30] : memref<2x8x16xbf16, #tpu.memory_space<vmem>>, vector<1x8x16xbf16>
    %54 = vector.shape_cast %53 : vector<1x8x16xbf16> to vector<8x16xbf16>
    %55 = vector.shape_cast %52 : vector<8x16xbf16> to vector<1x8x16xbf16>
    tpu.vector_store %arg8[%c1_28, %c0_29, %c0_30], %55 {strides = array<i32>} : memref<2x8x16xbf16, #tpu.memory_space<vmem>>, vector<1x8x16xbf16>,
    return
  }
  func.func @transform_0(%arg0: i32) -> (i32, i32) {
    %c0_i32 = arith.constant 0 : i32
    %c0_i32_0 = arith.constant 0 : i32
    return %arg0, %c0_i32 : i32, i32
  }
  func.func @transform_1(%arg0: i32) -> (i32, i32) {
    %c0_i32 = arith.constant 0 : i32
    %c0_i32_0 = arith.constant 0 : i32
    %c0_i32_1 = arith.constant 0 : i32
    return %c0_i32, %c0_i32_0 : i32, i32
  }
  func.func @transform_2(%arg0: i32) -> (i32, i32) {
    %c0_i32 = arith.constant 0 : i32
    %c0_i32_0 = arith.constant 0 : i32
    %c0_i32_1 = arith.constant 0 : i32
    return %c0_i32, %c0_i32_0 : i32, i32
  }
  func.func @transform_3(%arg0: i32) -> (i32, i32) {
    %c0_i32 = arith.constant 0 : i32
    %c0_i32_0 = arith.constant 0 : i32
    %c0_i32_1 = arith.constant 0 : i32
    return %c0_i32, %c0_i32_0 : i32, i32
  }
  func.func @transform_4(%arg0: i32) -> (i32, i32) {
    %c0_i32 = arith.constant 0 : i32
    %c0_i32_0 = arith.constant 0 : i32
    %c0_i32_1 = arith.constant 0 : i32
    return %c0_i32, %c0_i32_0 : i32, i32
  }
  func.func @transform_5(%arg0: i32) -> (i32, i32, i32) {
    %c0_i32 = arith.constant 0 : i32
    %c0_i32_0 = arith.constant 0 : i32
    %c0_i32_1 = arith.constant 0 : i32
    return %c0_i32, %arg0, %c0_i32_0 : i32, i32, i32
  }
  func.func @transform_6(%arg0: i32) -> (i32, i32, i32) {
    %c0_i32 = arith.constant 0 : i32
    %c0_i32_0 = arith.constant 0 : i32
    %c0_i32_1 = arith.constant 0 : i32
    return %c0_i32, %arg0, %c0_i32_0 : i32, i32, i32
  }
  func.func @transform_7(%arg0: i32) -> (i32, i32, i32) {
    %c0_i32 = arith.constant 0 : i32
    %c0_i32_0 = arith.constant 0 : i32
    %c0_i32_1 = arith.constant 0 : i32
    return %c0_i32, %arg0, %c0_i32_0 : i32, i32, i32
  }
}

</mosaic_0001>

<llo_original>
// kernel: tpu_custom_call.1
$region0: #{tpu_custom_call.1}
  #allocation0 [shape = 'u32[]', space=smem, size = 0x4, offset = 0x4, fixed_abs, tag = 'smem constant byte address 0x4 - core index']
  #allocation1 [shape = 'u32[144,128]{1,0:T(1,128)}', space=vmem, size = 0x12000, scoped, tag = 'internal scratch']
  %s0 = inlined_call_operand.hbm [shape: f32[8,128], index: 0, kind: input, shape index: {}]
  %s1 = inlined_call_operand.hbm [shape: f32[8,128], index: 1, kind: output, shape index: {}]
  %s2 = sld [smem:[#allocation0]]
  $region41: #{tpu_custom_call.1} parent=0
    _
  %s4 = ssub.s32 1, %s2
  %s5 = scalar_select 0, %s4, %s2
  $region1: #{tpu_custom_call.1} parent=0
    #allocation2 [shape = 'u8[4096]{0}', space=vmem, size = 0x1000, scoped, tag = 'input window, operand 0, single buffered']
    #allocation3 [shape = 's32[2]{0}', space=sflag, size = 0x8, scoped, tag = 'scoped memory for tpu_custom_call.1']
    #allocation4 [shape = 's32[2]{0}', space=sflag, size = 0x8, scoped, tag = 'scoped memory for tpu_custom_call.1']
    #allocation5 [shape = 'u8[4096]{0}', space=vmem, size = 0x1000, scoped, tag = 'output window, operand 0, single buffered']
    %6 = vsyncpa [#allocation3], 0
    %7 = vsyncpa [#allocation4], 0
    loop: start=0, step=1, limit=4
    $region2: #{tpu_custom_call.1} parent=1 // loop_pre_header
      _
    $region3: #{tpu_custom_call.1} parent=1 // loop_header
      %s9 = sphi 0, %s13
      %p10 = scmp.ge.s32.totalorder %s9, 4
      %s17 = sphi 0, %s17
      %s19 = sphi 0, %s17
      %s20 = sphi 0, %s19
      %s34 = sphi 0, %s20
      %s38 = sphi 0, %s38
      %s40 = sphi 0, %s38
      %s41 = sphi 0, %s40
      %s55 = sphi 0, %s41
    $region4: #{tpu_custom_call.1} parent=1 // loop_header_branch
      %12 = sbr.rel (%p10) target = $region8
    $region5: #{tpu_custom_call.1} parent=1 // loop_body
      %s14 = ssub.s32 %s9, 1
      %s15 = ssub.s32 %s9, 2
      %s16 = sadd.s32 %s9, 1
      %s18 = sadd.s32 %s17, 1
      %p21 = scmp.eq.s32.totalorder %s9, 1
      %p22 = scmp.ne.s32.totalorder %s17, %s19
      %p23 = scmp.eq.s32.totalorder %s9, 0
      %p24 = por %p22, %p23
      %p25 = scmp.ne.s32.totalorder %s17, %s19
      %p26 = scmp.eq.s32.totalorder %s14, 1
      %p27 = por %p25, %p26
      %p28 = scmp.ne.s32.totalorder %s19, %s20
      %p29 = scmp.eq.s32.totalorder %s14, 0
      %p30 = por %p28, %p29
      %p31 = scmp.ne.s32.totalorder %s19, %s20
      %p32 = scmp.eq.s32.totalorder %s15, 1
      %p33 = por %p31, %p32
      %p35 = scmp.ne.s32.totalorder %s20, %s34
      %p36 = scmp.eq.s32.totalorder %s15, 0
      %p37 = por %p35, %p36
      %s39 = sadd.s32 %s38, 1
      %p42 = scmp.eq.s32.totalorder %s9, 1
      %p43 = scmp.ne.s32.totalorder %s38, %s40
      %p44 = scmp.eq.s32.totalorder %s9, 0
      %p45 = por %p43, %p44
      %p46 = scmp.ne.s32.totalorder %s38, %s40
      %p47 = scmp.eq.s32.totalorder %s14, 1
      %p48 = por %p46, %p47
      %p49 = scmp.ne.s32.totalorder %s40, %s41
      %p50 = scmp.eq.s32.totalorder %s14, 0
      %p51 = por %p49, %p50
      %p52 = scmp.ne.s32.totalorder %s40, %s41
      %p53 = scmp.eq.s32.totalorder %s15, 1
      %p54 = por %p52, %p53
      %p56 = scmp.ne.s32.totalorder %s41, %s55
      %p57 = scmp.eq.s32.totalorder %s15, 0
      %p58 = por %p56, %p57
      %p59 = scmp.le.s32.totalorder 1, %s9
      %p60 = scmp.lt.s32.totalorder %s9, 3
      %p61 = pnand %p59, %p60
      %p62 = pneg %p61
      // Predicated region
      $region9: #{tpu_custom_call.1} parent=5 // pred_check
        _
      $region10: #{tpu_custom_call.1} parent=5 // pred_check_branch
        %64 = sbr.rel (%p61) target = $region12
      $region11: #{tpu_custom_call.1} parent=5 // pred_region
        %s65 = ssub.s32 %s9, 1
        // Predicated region
        $region13: #{tpu_custom_call.1} parent=11 // pred_check
          %p66 = pneg %p30
        $region14: #{tpu_custom_call.1} parent=11 // pred_check_branch
          %68 = sbr.rel (%p66) target = $region16
        $region15: #{tpu_custom_call.1} parent=11 // pred_region
          %s70 = ssub.s32 128, 128
          %71 = vsyncadd [#allocation3], %s70
          %s73 = sshll.u32 [#allocation2], 4
          %s74 = int_to_ptr.vmem [resolvable:$true] %s73
          %76 = dma.hbm_to_vmem [thread:$0]  %s0, 128, %s74, [#allocation3]
        $region16: #{tpu_custom_call.1} parent=11 // pred_fallthru
          _
      $region12: #{tpu_custom_call.1} parent=5 // pred_fallthru
        _
      %p77 = scmp.lt.s32.totalorder %s9, 2
      // Predicated region
      $region17: #{tpu_custom_call.1} parent=5 // pred_check
        %p78 = pneg %p77
      $region18: #{tpu_custom_call.1} parent=5 // pred_check_branch
        %80 = sbr.rel (%p78) target = $region20
      $region19: #{tpu_custom_call.1} parent=5 // pred_region
        _
      $region20: #{tpu_custom_call.1} parent=5 // pred_fallthru
        _
      %p81 = scmp.le.s32.totalorder 1, %s9
      %p82 = scmp.lt.s32.totalorder %s9, 3
      %p83 = pnand %p81, %p82
      %p84 = pneg %p83
      // Predicated region
      $region21: #{tpu_custom_call.1} parent=5 // pred_check
        _
      $region22: #{tpu_custom_call.1} parent=5 // pred_check_branch
        %86 = sbr.rel (%p83) target = $region24
      $region23: #{tpu_custom_call.1} parent=5 // pred_region
        %s87 = ssub.s32 %s9, 1
        // Predicated region
        $region25: #{tpu_custom_call.1} parent=23 // pred_check
          %p88 = pneg %p30
        $region26: #{tpu_custom_call.1} parent=23 // pred_check_branch
          %90 = sbr.rel (%p88) target = $region28
        $region27: #{tpu_custom_call.1} parent=23 // pred_region
          %91 = dma.done [#allocation3], 128
        $region28: #{tpu_custom_call.1} parent=23 // pred_fallthru
          _
        %p92 = pneg %p30
        %p93 = pneg %p27
        %p94 = pneg %p51
        %p95 = pneg %p48
        %v96 = vld [vmem:[#allocation2] sm:$0xff]
        %v97 = vadd.f32 %v96, 1.0
        %98 = vst [vmem:[#allocation5] sm:$0xff] %v97
        // Predicated region
        $region29: #{tpu_custom_call.1} parent=23 // pred_check
          %p99 = pneg %p48
        $region30: #{tpu_custom_call.1} parent=23 // pred_check_branch
          %101 = sbr.rel (%p99) target = $region32
        $region31: #{tpu_custom_call.1} parent=23 // pred_region
          %s103 = ssub.s32 128, 128
          %104 = vsyncadd [#allocation4], %s103
          %s106 = sshll.u32 [#allocation5], 4
          %s107 = int_to_ptr.vmem [resolvable:$true] %s106
          %109 = dma.vmem_to_hbm [thread:$0]  %s107, 128, %s1, [#allocation4]
        $region32: #{tpu_custom_call.1} parent=23 // pred_fallthru
          _
        // Predicated region
        $region33: #{tpu_custom_call.1} parent=23 // pred_check
          %p110 = pneg %p48
        $region34: #{tpu_custom_call.1} parent=23 // pred_check_branch
          %112 = sbr.rel (%p110) target = $region36
        $region35: #{tpu_custom_call.1} parent=23 // pred_region
          %113 = dma.done [#allocation4], 128
        $region36: #{tpu_custom_call.1} parent=23 // pred_fallthru
          _
      $region24: #{tpu_custom_call.1} parent=5 // pred_fallthru
        _
      %p114 = scmp.le.s32.totalorder 2, %s9
      // Predicated region
      $region37: #{tpu_custom_call.1} parent=5 // pred_check
        %p115 = pneg %p114
      $region38: #{tpu_custom_call.1} parent=5 // pred_check_branch
        %117 = sbr.rel (%p115) target = $region40
      $region39: #{tpu_custom_call.1} parent=5 // pred_region
        %s118 = ssub.s32 %s9, 2
      $region40: #{tpu_custom_call.1} parent=5 // pred_fallthru
        _
    $region6: #{tpu_custom_call.1} parent=1 // loop_footer
      %s13 = sadd.s32 1, %s9
    $region7: #{tpu_custom_call.1} parent=1 // loop_footer_branch
      %8 = sbr.rel target = $region3
    $region8: #{tpu_custom_call.1} parent=1 // loop_exit
      _
    %119 = vsyncpa [#allocation3], 1
    %s120 = scalar_lea.sflag [#allocation3], 1
    %121 = vsyncpa %s120, 1
    %122 = vsyncpa [#allocation4], 1
    %s123 = scalar_lea.sflag [#allocation4], 1
    %124 = vsyncpa %s123, 1

// kernel: tpu_custom_call.1
$region0: #{tpu_custom_call.1}
  #allocation0 [shape = 'u32[]', space=smem, size = 0x4, offset = 0x4, fixed_abs, tag = 'smem constant byte address 0x4 - core index']
  #allocation1 [shape = 'u32[144,128]{1,0:T(1,128)}', space=vmem, size = 0x12000, scoped, tag = 'internal scratch']
  %s0 = inlined_call_operand.hbm [shape: f32[8,32], index: 0, kind: input, shape index: {}]
  %s1 = inlined_call_operand.vmem [shape: f32[1,32], index: 1, kind: input, shape index: {}]
  %s2 = inlined_call_operand.vmem [shape: f32[1,32], index: 2, kind: input, shape index: {}]
  %s3 = inlined_call_operand.hbm [shape: bf16[32,96], index: 3, kind: input, shape index: {}]
  %s4 = inlined_call_operand.vmem [shape: f32[1,96], index: 4, kind: input, shape index: {}]
  %s5 = inlined_call_operand.hbm [shape: bf16[2,8,16], index: 5, kind: output, shape index: {0}]
  %s6 = inlined_call_operand.hbm [shape: bf16[2,8,16], index: 6, kind: output, shape index: {1}]
  %s7 = inlined_call_operand.hbm [shape: bf16[2,8,16], index: 7, kind: output, shape index: {2}]
  %8 = xla_tuple %s5, %s6, %s7
  %s9 = sld [smem:[#allocation0]]
  $region54: #{tpu_custom_call.1} parent=0
    _
  %s11 = ssub.s32 1, %s9
  %s12 = scalar_select 0, %s11, %s9
  $region1: #{tpu_custom_call.1} parent=0
    #allocation2 [shape = 'u8[4096]{0}', space=vmem, size = 0x1000, scoped, tag = 'input window, operand 0, single buffered']
    #allocation3 [shape = 's32[1]{0}', space=sflag, size = 0x4, scoped, tag = 'scoped memory for tpu_custom_call.1']
    #allocation4 [shape = 's32[1]{0}', space=sflag, size = 0x4, scoped, tag = 'scoped memory for tpu_custom_call.1']
    #allocation5 [shape = 'u8[8192]{0}', space=vmem, size = 0x2000, scoped, tag = 'input window, operand 3, single buffered']
    #allocation6 [shape = 's32[1]{0}', space=sflag, size = 0x4, scoped, tag = 'scoped memory for tpu_custom_call.1']
    #allocation7 [shape = 'u8[4096]{0}', space=vmem, size = 0x1000, scoped, tag = 'output window, operand 0, single buffered']
    #allocation8 [shape = 'u8[4096]{0}', space=vmem, size = 0x1000, scoped, tag = 'output window, operand 1, single buffered']
    #allocation9 [shape = 's32[1]{0}', space=sflag, size = 0x4, scoped, tag = 'scoped memory for tpu_custom_call.1']
    #allocation10 [shape = 'u8[4096]{0}', space=vmem, size = 0x1000, scoped, tag = 'output window, operand 2, single buffered']
    %13 = vsyncpa [#allocation3], 0
    %14 = vsyncpa [#allocation6], 0
    %15 = vsyncpa [#allocation4], 0
    %16 = vsyncpa [#allocation9], 0
    // Predicated region
    $region2: #{tpu_custom_call.1} parent=1 // pred_check
      _
    $region3: #{tpu_custom_call.1} parent=1 // pred_check_branch
      %18 = sbr.rel (0) target = $region5
    $region4: #{tpu_custom_call.1} parent=1 // pred_region
      %s20 = ssub.s32 128, 128
      %21 = vsyncadd [#allocation3], %s20
      %s23 = sshll.u32 [#allocation2], 4
      %s24 = int_to_ptr.vmem [resolvable:$true] %s23
      %26 = dma.hbm_to_vmem [thread:$0]  %s0, 128, %s24, [#allocation3]
    $region5: #{tpu_custom_call.1} parent=1 // pred_fallthru
      _
    // Predicated region
    $region6: #{tpu_custom_call.1} parent=1 // pred_check
      _
    $region7: #{tpu_custom_call.1} parent=1 // pred_check_branch
      %28 = sbr.rel (0) target = $region9
    $region8: #{tpu_custom_call.1} parent=1 // pred_region
      _
    $region9: #{tpu_custom_call.1} parent=1 // pred_fallthru
      _
    // Predicated region
    $region10: #{tpu_custom_call.1} parent=1 // pred_check
      _
    $region11: #{tpu_custom_call.1} parent=1 // pred_check_branch
      %30 = sbr.rel (0) target = $region13
    $region12: #{tpu_custom_call.1} parent=1 // pred_region
      _
    $region13: #{tpu_custom_call.1} parent=1 // pred_fallthru
      _
    // Predicated region
    $region14: #{tpu_custom_call.1} parent=1 // pred_check
      _
    $region15: #{tpu_custom_call.1} parent=1 // pred_check_branch
      %32 = sbr.rel (0) target = $region17
    $region16: #{tpu_custom_call.1} parent=1 // pred_region
      %s34 = ssub.s32 256, 256
      %35 = vsyncadd [#allocation6], %s34
      %s36 = sshll.u32 [#allocation5], 4
      %s37 = int_to_ptr.vmem [resolvable:$true] %s36
      %42 = dma.hbm_to_vmem [thread:$0]  %s3, 256, %s37, [#allocation6], 64, 64, 4
    $region17: #{tpu_custom_call.1} parent=1 // pred_fallthru
      _
    // Predicated region
    $region18: #{tpu_custom_call.1} parent=1 // pred_check
      _
    $region19: #{tpu_custom_call.1} parent=1 // pred_check_branch
      %44 = sbr.rel (0) target = $region21
    $region20: #{tpu_custom_call.1} parent=1 // pred_region
      _
    $region21: #{tpu_custom_call.1} parent=1 // pred_fallthru
      _
    // Predicated region
    $region22: #{tpu_custom_call.1} parent=1 // pred_check
      _
    $region23: #{tpu_custom_call.1} parent=1 // pred_check_branch
      %46 = sbr.rel (0) target = $region25
    $region24: #{tpu_custom_call.1} parent=1 // pred_region
      %47 = dma.done [#allocation3], 128
    $region25: #{tpu_custom_call.1} parent=1 // pred_fallthru
      _
    // Predicated region
    $region26: #{tpu_custom_call.1} parent=1 // pred_check
      _
    $region27: #{tpu_custom_call.1} parent=1 // pred_check_branch
      %49 = sbr.rel (0) target = $region29
    $region28: #{tpu_custom_call.1} parent=1 // pred_region
      %50 = dma.done [#allocation6], 256
    $region29: #{tpu_custom_call.1} parent=1 // pred_fallthru
      _
    %v52 = vld [vmem:[#allocation2] sm:$0xff]
    %v53 = vld [vmem:[%s1] sm:$0x1]
    %v54 = vld [vmem:[%s2] sm:$0x1]
    %vm55 = vcmask 261120
    %v56 = vsel %vm55, %v52, 0.0
    %57 = vadd.xlane.f32.xlu0 %v56
    %v58 = vpop.xlane.xlu0 %57
    %v59 = vrcp.pop 32.0
    %v60 = vmul.f32 %v58, %v59
    %v61 = vsub.f32 %v52, %v60
    %v62 = vmul.f32 %v61, %v61
    %v63 = vsel %vm55, %v62, 0.0
    %64 = vadd.xlane.f32.xlu0 %v63
    %v65 = vpop.xlane.xlu0 %64
    %v66 = vmul.f32 %v65, %v59
    %v67 = vadd.f32 %v66, 1e-05
    %v68 = vrsqrt.pop %v67
    %v69 = vmul.f32 %v61, %v68
    %v71 = vlaneseq
    %v72 = vshrl.u32 %v71, 7
    %v73 = vsub.s32 0, %v72
    %v74 = vrot.slane %v53, %v73
    %v76 = vmul.f32 %v69, %v74
    %v78 = vlaneseq
    %v79 = vshrl.u32 %v78, 7
    %v80 = vsub.s32 0, %v79
    %v81 = vrot.slane %v54, %v80
    %v83 = vadd.f32 %v76, %v81
    %v84 = vpack.c.bf16 %v83, %v83
    %v85 = vld [vmem:[#allocation5] sm:$0xf]
    %v86 = vld [vmem:[#allocation5 + $0x4] sm:$0xf]
    %v87 = vld [vmem:[#allocation5 + $0x8] sm:$0xf]
    %v88 = vld [vmem:[#allocation5 + $0xc] sm:$0xf]
    %v89 = vld [vmem:[%s4] sm:$0x1]
    %v91 = vlaneseq
    %v92 = vshrl.u32 %v91, 7
    %v93 = vsub.s32 0, %v92
    %v94 = vrot.slane %v89, %v93
    %v100 = vunpack.c.l.b16 %v85
    %v101 = vunpack.c.l.b16 %v86
    %v102 = vunpack.c.l.b16 %v87
    %v103 = vunpack.c.l.b16 %v88
    %v104 = vpack.c.b16 %v101, %v100
    %v105 = vpack.c.b16 %v103, %v102
    %v109 = vsel %vm55, %v84, 0
    %111 = vmatprep.subr.bf16.mxu0 0
    %112 = vmatpush1.bf16.msra.mxu0 %v104
    %113 = vmatprep.subr.bf16.mxu0 0
    %114 = vmatpush1.bf16.msra.mxu0 %v105
    %115 = vmatprep.subr.bf16.mxu0 0
    %116 = vmatpush1.bf16.msra.mxu0 0
    %117 = vmatprep.subr.bf16.mxu0 0
    %118 = vmatpush1.bf16.msra.mxu0 0
    %119 = vmatprep.subr.bf16.mxu0 0
    %120 = vmatpush1.bf16.msra.mxu0 0
    %121 = vmatprep.subr.bf16.mxu0 0
    %122 = vmatpush1.bf16.msra.mxu0 0
    %123 = vmatprep.subr.bf16.mxu0 0
    %124 = vmatpush1.bf16.msra.mxu0 0
    %125 = vmatprep.subr.bf16.mxu0 0
    %126 = vmatpush1.bf16.msra.mxu0 0
    %127 = vmatprep.subr.bf16.mxu0 0
    %128 = vmatpush1.bf16.msra.mxu0 0
    %129 = vmatprep.subr.bf16.mxu0 0
    %130 = vmatpush1.bf16.msra.mxu0 0
    %131 = vmatprep.subr.bf16.mxu0 0
    %132 = vmatpush1.bf16.msra.mxu0 0
    %133 = vmatprep.subr.bf16.mxu0 0
    %134 = vmatpush1.bf16.msra.mxu0 0
    %135 = vmatprep.subr.bf16.mxu0 0
    %136 = vmatpush1.bf16.msra.mxu0 0
    %137 = vmatprep.subr.bf16.mxu0 0
    %138 = vmatpush1.bf16.msra.mxu0 0
    %139 = vmatprep.subr.bf16.mxu0 0
    %140 = vmatpush1.bf16.msra.mxu0 0
    %141 = vmatprep.subr.bf16.mxu0 0
    %142 = vmatpush1.bf16.msra.mxu0 0
    %143 = vmatprep.mubr.bf16.mxu0 0
    %144 = vmatmul.mubr.bf16.gmra.mrb[0].mxu0 %v109
    %v145 = vpop.f32.mrb[0].mxu0
    %v146 = vadd.f32 %v94, %v145
    %v147 = vpop.f32.mrb[0].mxu0
    %v148 = vpop.f32.mrb[0].mxu0
    %v149 = vpop.f32.mrb[0].mxu0
    %150 = vdwg.mxu0
    %v151 = vpack.c.bf16 %v146, %v146
    %vm152 = vcmask 125952
    %153 = vst.msk [vmem:[#allocation7] sm:$0xf] %vm152, %v151
    %v155 = vunpack.c.l.b16 %v151
    %v156 = vpack.c.b16 %v155, %v155
    %157 = vrot.lane.b32.xlu0 %v156, 96
    %v158 = vpop.permute.xlu0 %157
    %160 = vst.msk [vmem:[#allocation8] sm:$0xf] %vm152, %v158
    %161 = vrot.lane.b32.xlu0 %v156, 64
    %v162 = vpop.permute.xlu0 %161
    %164 = vst.msk [vmem:[#allocation10] sm:$0xf] %vm152, %v162
    %165 = vrot.lane.b32.xlu0 %v156, 112
    %v166 = vpop.permute.xlu0 %165
    %s168 = scalar_lea.vmem [#allocation7], 4
    %169 = vst.msk [vmem:[%s168] sm:$0xf] %vm152, %v166
    %170 = vrot.lane.b32.xlu0 %v156, 80
    %v171 = vpop.permute.xlu0 %170
    %s173 = scalar_lea.vmem [#allocation8], 4
    %174 = vst.msk [vmem:[%s173] sm:$0xf] %vm152, %v171
    %175 = vrot.lane.b32.xlu0 %v156, 48
    %v176 = vpop.permute.xlu0 %175
    %s178 = scalar_lea.vmem [#allocation10], 4
    %179 = vst.msk [vmem:[%s178] sm:$0xf] %vm152, %v176
    // Predicated region
    $region30: #{tpu_custom_call.1} parent=1 // pred_check
      _
    $region31: #{tpu_custom_call.1} parent=1 // pred_check_branch
      %181 = sbr.rel (0) target = $region33
    $region32: #{tpu_custom_call.1} parent=1 // pred_region
      %s183 = ssub.s32 128, 128
      %184 = vsyncadd [#allocation4], %s183
      %s185 = sshll.u32 [#allocation7], 4
      %s186 = int_to_ptr.vmem [resolvable:$true] %s185
      %191 = dma.vmem_to_hbm [thread:$0]  %s186, 128, %s5, [#allocation4], 64, 64, 4
    $region33: #{tpu_custom_call.1} parent=1 // pred_fallthru
      _
    // Predicated region
    $region34: #{tpu_custom_call.1} parent=1 // pred_check
      _
    $region35: #{tpu_custom_call.1} parent=1 // pred_check_branch
      %193 = sbr.rel (0) target = $region37
    $region36: #{tpu_custom_call.1} parent=1 // pred_region
      %s195 = ssub.s32 128, 128
      %196 = vsyncadd [#allocation9], %s195
      %s197 = sshll.u32 [#allocation8], 4
      %s198 = int_to_ptr.vmem [resolvable:$true] %s197
      %203 = dma.vmem_to_hbm [thread:$0]  %s198, 128, %s6, [#allocation9], 64, 64, 4
    $region37: #{tpu_custom_call.1} parent=1 // pred_fallthru
      _
    // Predicated region
    $region38: #{tpu_custom_call.1} parent=1 // pred_check
      _
    $region39: #{tpu_custom_call.1} parent=1 // pred_check_branch
      %205 = sbr.rel (0) target = $region41
    $region40: #{tpu_custom_call.1} parent=1 // pred_region
      %s207 = ssub.s32 128, 128
      %208 = vsyncadd [#allocation9], %s207
      %s209 = sshll.u32 [#allocation10], 4
      %s210 = int_to_ptr.vmem [resolvable:$true] %s209
      %215 = dma.vmem_to_hbm [thread:$0]  %s210, 128, %s7, [#allocation9], 64, 64, 4
    $region41: #{tpu_custom_call.1} parent=1 // pred_fallthru
      _
    // Predicated region
    $region42: #{tpu_custom_call.1} parent=1 // pred_check
      _
    $region43: #{tpu_custom_call.1} parent=1 // pred_check_branch
      %217 = sbr.rel (0) target = $region45
    $region44: #{tpu_custom_call.1} parent=1 // pred_region
      %218 = dma.done [#allocation4], 128
    $region45: #{tpu_custom_call.1} parent=1 // pred_fallthru
      _
    // Predicated region
    $region46: #{tpu_custom_call.1} parent=1 // pred_check
      _
    $region47: #{tpu_custom_call.1} parent=1 // pred_check_branch
      %220 = sbr.rel (0) target = $region49
    $region48: #{tpu_custom_call.1} parent=1 // pred_region
      %221 = dma.done [#allocation9], 128
    $region49: #{tpu_custom_call.1} parent=1 // pred_fallthru
      _
    // Predicated region
    $region50: #{tpu_custom_call.1} parent=1 // pred_check
      _
    $region51: #{tpu_custom_call.1} parent=1 // pred_check_branch
      %223 = sbr.rel (0) target = $region53
    $region52: #{tpu_custom_call.1} parent=1 // pred_region
      %224 = dma.done [#allocation9], 128
    $region53: #{tpu_custom_call.1} parent=1 // pred_fallthru
      _
    %225 = vsyncpa [#allocation3], 1
    %226 = vsyncpa [#allocation6], 1
    %227 = vsyncpa [#allocation4], 1
    %228 = vsyncpa [#allocation9], 1

</llo_original>
